<compile_context>
chip_gen: v5e
topology: v5e:2x2
jax: 0.10.0
libtpu: 0.0.40
codegen_flags: <defaults>
</compile_context>

<pallas_src>
import functools
import math

import jax
import jax.numpy as jnp
from jax.experimental import pallas as pl
from jax.experimental.pallas import tpu as pltpu


def aa_seq_embed_kernel(src_ref, mods_ref, tbl_ref, out_ref, *,
                        v_aa, v_mod, max_len, ksec):
    # Inputs are sequence-major: [S, B] int32 (zero-padded sequences).
    S, B = src_ref.shape
    src = src_ref[...]
    mods = mods_ref[...]

    # ---- SeqPositionalEmbed indices (fw + rev) --------------------------------
    vals = (src != 0).astype(jnp.float32)                            # [S, B]
    # Inclusive prefix sum along the sequence axis via a tiny lower-triangular
    # matmul.  Operands are exact small integers, so any MXU precision is exact.
    row = jax.lax.broadcasted_iota(jnp.int32, (S, S), 0)
    col = jax.lax.broadcasted_iota(jnp.int32, (S, S), 1)
    tri = (col <= row).astype(jnp.float32)                           # [S, S]
    csum = jnp.dot(tri, vals, preferred_element_type=jnp.float32)    # [S, B]
    total = csum[S - 1:S, :]                                         # [1, B] lengths
    fw_idx = csum.astype(jnp.int32)                                  # pe[cumsum]
    # inverted branch (flip -> cumsum -> flip) == suffix sum:
    rev_idx = (total - csum + vals).astype(jnp.int32)

    # ---- fused multi-hot gather, block-diagonal over the batch ----------------
    off_mod = v_aa
    off_fw = v_aa + v_mod
    off_rev = off_fw + max_len

    iota_k = jax.lax.broadcasted_iota(jnp.int32, (S, ksec), 1)       # [S, ksec]
    blocks = []
    for b in range(B):   # B is static & tiny; blocks land at 128-aligned lanes.
        hot = ((iota_k == src[:, b:b + 1])
               | (iota_k == mods[:, b:b + 1] + off_mod)
               | (iota_k == fw_idx[:, b:b + 1] + off_fw)
               | (iota_k == rev_idx[:, b:b + 1] + off_rev))
        blocks.append(hot.astype(jnp.float32))
    mh = jnp.concatenate(blocks, axis=1) if B > 1 else blocks[0]     # [S, B*ksec]

    # ONE MXU matmul == (aa_emb + mod_emb)*sqrt(D_emb) ++ fw_pe ++ rev_pe for every
    # (s, b), landing directly in the lane-dense [S, B*ninp] output layout.
    # precision=HIGHEST keeps the f32 table rows (gathered by exact 0/1 weights)
    # bit-faithful across TPU generations.
    out_ref[...] = jnp.dot(mh, tbl_ref[...],
                           precision=jax.lax.Precision.HIGHEST,
                           preferred_element_type=jnp.float32)


def pack_embedding_table(aa_w, mod_w, pe, batch_size):
    """Host-side, one-time packing of all lookup tables into one MXU operand.

    Per-batch section (rows, within a 128-aligned block):
        [0, V_aa)                 : aa_w  * sqrt(D_emb)  -> cols [0, D_emb)
        [V_aa, V_aa+V_mod)        : mod_w * sqrt(D_emb)  -> cols [0, D_emb)
        next max_len rows         : pe                   -> cols [D_emb, D_emb+D_pos)
        next max_len rows         : pe                   -> cols [D_emb+D_pos, ninp)
    Sections are placed block-diagonally over the batch so the matmul output is the
    lane-dense [S, B*ninp] slab (only worthwhile while B is small — here B*ninp=128).
    """
    v_aa, d_emb = aa_w.shape
    v_mod = mod_w.shape[0]
    max_len, d_pos = pe.shape
    ninp = d_emb + 2 * d_pos
    k = v_aa + v_mod + 2 * max_len
    ksec = int(-(-k // 128) * 128)            # 128-aligned per-batch section
    scale = math.sqrt(d_emb)                  # bake the *sqrt(ninp_embed) into params
    sec = jnp.zeros((ksec, ninp), jnp.float32)
    sec = sec.at[:v_aa, :d_emb].set(aa_w * scale)
    sec = sec.at[v_aa:v_aa + v_mod, :d_emb].set(mod_w * scale)
    sec = sec.at[v_aa + v_mod:v_aa + v_mod + max_len, d_emb:d_emb + d_pos].set(pe)
    sec = sec.at[v_aa + v_mod + max_len:k, d_emb + d_pos:].set(pe)
    tbl = jnp.zeros((batch_size * ksec, batch_size * ninp), jnp.float32)
    for b in range(batch_size):
        tbl = tbl.at[b * ksec:(b + 1) * ksec, b * ninp:(b + 1) * ninp].set(sec)
    meta = dict(v_aa=v_aa, v_mod=v_mod, max_len=max_len, ninp=ninp,
                ksec=ksec, batch_size=batch_size)
    return tbl, meta


def aa_sequence_embedding(src, mods, packed_tbl, meta):
    """src, mods: [B, S] int.  Returns [S, B, ninp] f32 (PyTorch module convention)."""
    B, S = src.shape
    ninp, ksec = meta["ninp"], meta["ksec"]
    assert meta["batch_size"] == B, "table was packed for a different batch size"
    # pe index can reach the sequence length; guard against silent zero rows.
    assert meta["max_len"] > S, "max_len must exceed the sequence length"

    kernel = functools.partial(aa_seq_embed_kernel, v_aa=meta["v_aa"],
                               v_mod=meta["v_mod"], max_len=meta["max_len"],
                               ksec=ksec)

    # 64-byte layout plumbing: s-major inputs so the matmul result is already the
    # lane-dense [S, B*ninp] output slab (no in-kernel transposes / masked stores).
    src_t = jnp.transpose(src).astype(jnp.int32)      # [S, B]
    mods_t = jnp.transpose(mods).astype(jnp.int32)    # [S, B]

    flops = 2 * S * (B * ksec) * (B * ninp) + 2 * S * S * B
    bytes_accessed = 2 * S * B * 4 + packed_tbl.size * 4 + S * B * ninp * 4

    out = pl.pallas_call(
        kernel,
        out_shape=jax.ShapeDtypeStruct((S, B * ninp), jnp.float32),
        in_specs=[pl.BlockSpec(memory_space=pltpu.MemorySpace.VMEM)] * 3,
        out_specs=pl.BlockSpec(memory_space=pltpu.MemorySpace.VMEM),
        cost_estimate=pl.CostEstimate(flops=flops, transcendentals=0,
                                      bytes_accessed=bytes_accessed),
    )(src_t, mods_t, packed_tbl)
    # Free, layout-preserving view (contiguous split of the last dim): no transpose,
    # no extra HBM pass.
    return out.reshape(S, B, ninp)


def make_pe(max_len, dims_add):
    """Builds the SeqPositionalEmbed `pe` buffer exactly like the torch __init__
    (including its unusual `-log(10000)/dims_add + 1` exponent — faithful to spec)."""
    pe = jnp.zeros((max_len, dims_add), jnp.float32)
    position = jnp.arange(max_len, dtype=jnp.float32)[:, None]
    div_term_enum = jnp.arange(0, dims_add, 2, dtype=jnp.float32)
    div_term_denom = -math.log(10000.0) / dims_add + 1
    div_term = jnp.exp(div_term_enum * div_term_denom)
    pe = pe.at[:, 0::2].set(jnp.sin(position * div_term))
    pe = pe.at[:, 1::2].set(jnp.cos(position * div_term))
    pe = pe.at[0, :].set(0.0)
    return pe


def reference(src, mods, aa_w, mod_w, pe, ninp_embed):
    """Pure-JAX reference of the PyTorch forward (for validation)."""
    tok = (aa_w[src] + mod_w[mods]) * math.sqrt(ninp_embed)          # [B,S,D]
    vals = (src != 0).astype(jnp.int32)
    fw = pe[jnp.cumsum(vals, axis=1)]                                # [B,S,Dp]
    rev = jnp.flip(pe[jnp.cumsum(jnp.flip(vals, axis=1), axis=1)], axis=1)
    out = jnp.concatenate([tok, fw, rev], axis=-1)                   # [B,S,ninp]
    return jnp.transpose(out, (1, 0, 2))                             # [S,B,ninp]


if __name__ == "__main__":
    # synthetic constants (module's `constants` module), kept small
    MAX_TENSOR_SEQUENCE = 8
    AAS_NUM = 26
    N_MODIFICATION = 7

    ninp = 64
    position_ratio = 0.1
    positional_ninp = int(ninp / 2 * position_ratio)
    if positional_ninp % 2:
        positional_ninp += 1
    ninp_embed = int(ninp - 2 * positional_ninp)
    max_len = MAX_TENSOR_SEQUENCE * 4

    key = jax.random.PRNGKey(0)
    k1, k2, k3, k4 = jax.random.split(key, 4)

    # deterministic parameter init (matches init_weights ranges)
    aa_w = jax.random.uniform(k1, (AAS_NUM + 1, ninp_embed), jnp.float32, -0.1, 0.1)
    mod_w = jax.random.uniform(k2, (N_MODIFICATION + 1, ninp_embed), jnp.float32,
                               -0.001, 0.001)
    pe = make_pe(max_len, positional_ninp)

    # inputs: [B, S] integer sequences, zero-padded at the end
    B, S = 2, 8
    lengths = jnp.array([6, 4])
    pos = jnp.arange(S)[None, :]
    mask = pos < lengths[:, None]
    src = jnp.where(mask, jax.random.randint(k3, (B, S), 1, AAS_NUM + 1), 0).astype(jnp.int32)
    mods = jnp.where(mask, jax.random.randint(k4, (B, S), 1, N_MODIFICATION + 1), 0).astype(jnp.int32)

    # one-time host-side packing of all tables into a single block-diagonal operand
    packed_tbl, meta = pack_embedding_table(aa_w, mod_w, pe, batch_size=B)

    out = jax.block_until_ready(aa_sequence_embedding(src, mods, packed_tbl, meta))

    ref = reference(src, mods, aa_w, mod_w, pe, ninp_embed)
    assert out.shape == (S, B, ninp), out.shape
    assert jnp.allclose(out, ref, atol=1e-5), "mismatch vs pure-JAX reference"
    print("KERNEL_OK")
</pallas_src>

<mosaic_0001>
module attributes {stable_mosaic.version = 11 : i64} {
  func.func @aa_seq_embed_kernel(%arg0: memref<8x2xi32, #tpu.memory_space<vmem>>, %arg1: memref<8x2xi32, #tpu.memory_space<vmem>>, %arg2: memref<256x128xf32, #tpu.memory_space<vmem>>, %arg3: memref<8x128xf32, #tpu.memory_space<vmem>>) attributes {dimension_semantics = [], scalar_prefetch = 0 : i64, scratch_operands = 0 : i64, tpu.core_type = #tpu.core_type<tc>} {
    %c0 = arith.constant 0 : index
    %c0_0 = arith.constant 0 : index
    %0 = vector.load %arg0[%c0, %c0_0] : memref<8x2xi32, #tpu.memory_space<vmem>>, vector<8x2xi32>
    %c0_1 = arith.constant 0 : index
    %c0_2 = arith.constant 0 : index
    %1 = vector.load %arg1[%c0_1, %c0_2] : memref<8x2xi32, #tpu.memory_space<vmem>>, vector<8x2xi32>
    %c0_i32 = arith.constant 0 : i32
    %2 = vector.broadcast %c0_i32 : i32 to vector<8x2xi32>
    %3 = arith.cmpi ne, %0, %2 : vector<8x2xi32>
    %4 = arith.extui %3 : vector<8x2xi1> to vector<8x2xi32>
    %5 = arith.sitofp %4 : vector<8x2xi32> to vector<8x2xf32>
    %6 = tpu.iota {dimensions = array<i32: 0>} : vector<8x8xi32>
    %7 = tpu.iota {dimensions = array<i32: 1>} : vector<8x8xi32>
    %8 = arith.cmpi sle, %7, %6 : vector<8x8xi32>
    %9 = arith.extui %8 : vector<8x8xi1> to vector<8x8xi32>
    %10 = arith.sitofp %9 : vector<8x8xi32> to vector<8x8xf32>
    %cst = arith.constant dense<0.000000e+00> : vector<8x2xf32>
    %11 = tpu.matmul %10, %5, %cst {dimension_numbers = #tpu.dot_dimension_numbers<[1], [0], [0], [1], [0, 0, 1, 1], [], []>} : vector<8x8xf32>, vector<8x2xf32>, vector<8x2xf32> -> vector<8x2xf32>
    %12 = vector.extract_strided_slice %11 {offsets = [7, 0], sizes = [1, 2], strides = [1, 1]} : vector<8x2xf32> to vector<1x2xf32>
    %13 = arith.fptosi %11 : vector<8x2xf32> to vector<8x2xi32>
    %14 = vector.broadcast %12 : vector<1x2xf32> to vector<8x2xf32>
    %15 = arith.subf %14, %11 : vector<8x2xf32>
    %16 = arith.addf %15, %5 : vector<8x2xf32>
    %17 = arith.fptosi %16 : vector<8x2xf32> to vector<8x2xi32>
    %18 = tpu.iota {dimensions = array<i32: 1>} : vector<8x128xi32>
    %19 = vector.extract_strided_slice %0 {offsets = [0, 0], sizes = [8, 1], strides = [1, 1]} : vector<8x2xi32> to vector<8x1xi32>
    %20 = vector.broadcast %19 : vector<8x1xi32> to vector<8x128xi32>
    %21 = arith.cmpi eq, %18, %20 : vector<8x128xi32>
    %22 = vector.extract_strided_slice %1 {offsets = [0, 0], sizes = [8, 1], strides = [1, 1]} : vector<8x2xi32> to vector<8x1xi32>
    %c27_i32 = arith.constant 27 : i32
    %23 = vector.broadcast %c27_i32 : i32 to vector<8x1xi32>
    %24 = arith.addi %22, %23 : vector<8x1xi32>
    %25 = vector.broadcast %24 : vector<8x1xi32> to vector<8x128xi32>
    %26 = arith.cmpi eq, %18, %25 : vector<8x128xi32>
    %27 = arith.ori %21, %26 : vector<8x128xi1>
    %28 = vector.extract_strided_slice %13 {offsets = [0, 0], sizes = [8, 1], strides = [1, 1]} : vector<8x2xi32> to vector<8x1xi32>
    %c35_i32 = arith.constant 35 : i32
    %29 = vector.broadcast %c35_i32 : i32 to vector<8x1xi32>
    %30 = arith.addi %28, %29 : vector<8x1xi32>
    %31 = vector.broadcast %30 : vector<8x1xi32> to vector<8x128xi32>
    %32 = arith.cmpi eq, %18, %31 : vector<8x128xi32>
    %33 = arith.ori %27, %32 : vector<8x128xi1>
    %34 = vector.extract_strided_slice %17 {offsets = [0, 0], sizes = [8, 1], strides = [1, 1]} : vector<8x2xi32> to vector<8x1xi32>
    %c67_i32 = arith.constant 67 : i32
    %35 = vector.broadcast %c67_i32 : i32 to vector<8x1xi32>
    %36 = arith.addi %34, %35 : vector<8x1xi32>
    %37 = vector.broadcast %36 : vector<8x1xi32> to vector<8x128xi32>
    %38 = arith.cmpi eq, %18, %37 : vector<8x128xi32>
    %39 = arith.ori %33, %38 : vector<8x128xi1>
    %40 = arith.extui %39 : vector<8x128xi1> to vector<8x128xi32>
    %41 = arith.sitofp %40 : vector<8x128xi32> to vector<8x128xf32>
    %42 = vector.extract_strided_slice %0 {offsets = [0, 1], sizes = [8, 1], strides = [1, 1]} : vector<8x2xi32> to vector<8x1xi32>
    %43 = vector.broadcast %42 : vector<8x1xi32> to vector<8x128xi32>
    %44 = arith.cmpi eq, %18, %43 : vector<8x128xi32>
    %45 = vector.extract_strided_slice %1 {offsets = [0, 1], sizes = [8, 1], strides = [1, 1]} : vector<8x2xi32> to vector<8x1xi32>
    %c27_i32_3 = arith.constant 27 : i32
    %46 = vector.broadcast %c27_i32_3 : i32 to vector<8x1xi32>
    %47 = arith.addi %45, %46 : vector<8x1xi32>
    %48 = vector.broadcast %47 : vector<8x1xi32> to vector<8x128xi32>
    %49 = arith.cmpi eq, %18, %48 : vector<8x128xi32>
    %50 = arith.ori %44, %49 : vector<8x128xi1>
    %51 = vector.extract_strided_slice %13 {offsets = [0, 1], sizes = [8, 1], strides = [1, 1]} : vector<8x2xi32> to vector<8x1xi32>
    %c35_i32_4 = arith.constant 35 : i32
    %52 = vector.broadcast %c35_i32_4 : i32 to vector<8x1xi32>
    %53 = arith.addi %51, %52 : vector<8x1xi32>
    %54 = vector.broadcast %53 : vector<8x1xi32> to vector<8x128xi32>
    %55 = arith.cmpi eq, %18, %54 : vector<8x128xi32>
    %56 = arith.ori %50, %55 : vector<8x128xi1>
    %57 = vector.extract_strided_slice %17 {offsets = [0, 1], sizes = [8, 1], strides = [1, 1]} : vector<8x2xi32> to vector<8x1xi32>
    %c67_i32_5 = arith.constant 67 : i32
    %58 = vector.broadcast %c67_i32_5 : i32 to vector<8x1xi32>
    %59 = arith.addi %57, %58 : vector<8x1xi32>
    %60 = vector.broadcast %59 : vector<8x1xi32> to vector<8x128xi32>
    %61 = arith.cmpi eq, %18, %60 : vector<8x128xi32>
    %62 = arith.ori %56, %61 : vector<8x128xi1>
    %63 = arith.extui %62 : vector<8x128xi1> to vector<8x128xi32>
    %64 = arith.sitofp %63 : vector<8x128xi32> to vector<8x128xf32>
    %65 = tpu.concatenate %41, %64 in 1 : vector<8x128xf32>, vector<8x128xf32> -> vector<8x256xf32>
    %c0_6 = arith.constant 0 : index
    %c0_7 = arith.constant 0 : index
    %66 = vector.load %arg2[%c0_6, %c0_7] : memref<256x128xf32, #tpu.memory_space<vmem>>, vector<256x128xf32>
    %cst_8 = arith.constant dense<0.000000e+00> : vector<8x128xf32>
    %67 = tpu.matmul %65, %66, %cst_8 {dimension_numbers = #tpu.dot_dimension_numbers<[1], [0], [0], [1], [0, 0, 1, 1], [], []>, precision = #tpu.contract_precision<fp32>} : vector<8x256xf32>, vector<256x128xf32>, vector<8x128xf32> -> vector<8x128xf32>
    %c0_9 = arith.constant 0 : index
    %c0_10 = arith.constant 0 : index
    %68 = vector.load %arg3[%c0_9, %c0_10] : memref<8x128xf32, #tpu.memory_space<vmem>>, vector<8x128xf32>
    tpu.vector_store %arg3[%c0_9, %c0_10], %67 {strides = array<i32>} : memref<8x128xf32, #tpu.memory_space<vmem>>, vector<8x128xf32>,
    return
  }
}

</mosaic_0001>

<llo_original>
// kernel: tpu_custom_call.1
$region0: #{tpu_custom_call.1}
  #allocation0 [shape = 'u32[]', space=smem, size = 0x4, offset = 0x4, fixed_abs, tag = 'smem constant byte address 0x4 - core index']
  #allocation1 [shape = 'u32[72,128]{1,0:T(1,128)}', space=vmem, size = 0x9000, scoped, tag = 'internal scratch']
  %s0 = inlined_call_operand.vmem [shape: s32[8,2], index: 0, kind: input, shape index: {}]
  %s1 = inlined_call_operand.vmem [shape: s32[8,2], index: 1, kind: input, shape index: {}]
  %s2 = inlined_call_operand.hbm [shape: f32[256,128], index: 2, kind: input, shape index: {}]
  %s3 = inlined_call_operand.hbm [shape: f32[8,128], index: 3, kind: output, shape index: {}]
  %s4 = sld [smem:[#allocation0]]
  $region26: #{tpu_custom_call.1} parent=0
    _
  %s6 = ssub.s32 1, %s4
  %s7 = scalar_select 0, %s6, %s4
  $region1: #{tpu_custom_call.1} parent=0
    #allocation2 [shape = 'u8[131072]{0}', space=vmem, size = 0x20000, scoped, tag = 'input window, operand 2, single buffered']
    #allocation3 [shape = 's32[1]{0}', space=sflag, size = 0x4, scoped, tag = 'scoped memory for tpu_custom_call.1']
    #allocation4 [shape = 's32[1]{0}', space=sflag, size = 0x4, scoped, tag = 'scoped memory for tpu_custom_call.1']
    #allocation5 [shape = 'u8[4096]{0}', space=vmem, size = 0x1000, scoped, tag = 'output window, operand 0, single buffered']
    %8 = vsyncpa [#allocation3], 0
    %9 = vsyncpa [#allocation4], 0
    // Predicated region
    $region2: #{tpu_custom_call.1} parent=1 // pred_check
      _
    $region3: #{tpu_custom_call.1} parent=1 // pred_check_branch
      %11 = sbr.rel (0) target = $region5
    $region4: #{tpu_custom_call.1} parent=1 // pred_region
      _
    $region5: #{tpu_custom_call.1} parent=1 // pred_fallthru
      _
    // Predicated region
    $region6: #{tpu_custom_call.1} parent=1 // pred_check
      _
    $region7: #{tpu_custom_call.1} parent=1 // pred_check_branch
      %13 = sbr.rel (0) target = $region9
    $region8: #{tpu_custom_call.1} parent=1 // pred_region
      _
    $region9: #{tpu_custom_call.1} parent=1 // pred_fallthru
      _
    // Predicated region
    $region10: #{tpu_custom_call.1} parent=1 // pred_check
      _
    $region11: #{tpu_custom_call.1} parent=1 // pred_check_branch
      %15 = sbr.rel (0) target = $region13
    $region12: #{tpu_custom_call.1} parent=1 // pred_region
      %17 = vsyncadd [#allocation3], 0
      %s18 = sshll.u32 %s2, 4
      %s19 = int_to_ptr.hbm [resolvable:$true] %s18
      %s20 = sshll.u32 [#allocation2], 4
      %s21 = int_to_ptr.vmem [resolvable:$true] %s20
      %26 = dma.hbm_to_vmem [thread:$0]  %s19, 4096, %s21, [#allocation3], 128, 128, 8
    $region13: #{tpu_custom_call.1} parent=1 // pred_fallthru
      _
    // Predicated region
    $region14: #{tpu_custom_call.1} parent=1 // pred_check
      _
    $region15: #{tpu_custom_call.1} parent=1 // pred_check_branch
      %28 = sbr.rel (0) target = $region17
    $region16: #{tpu_custom_call.1} parent=1 // pred_region
      %30 = dma.done [#allocation3], 4096
    $region17: #{tpu_custom_call.1} parent=1 // pred_fallthru
      _
    %v31 = vld [vmem:[%s0] sm:$0xff]
    %v32 = vld [vmem:[%s1] sm:$0xff]
    %vm33 = vcmp.ne.s32.totalorder %v31, 0
    %v34 = vsel %vm33, 1, 0
    %v35 = vcvt.s32.f32 %v34
    %v36 = vlaneseq
    %v37 = vshrl.u32 %v36, 7
    %v38 = vlaneseq
    %v39 = vand.u32 %v38, 127
    %vm40 = vcmp.le.s32.totalorder %v39, %v37
    %v41 = vsel %vm40, 1, 0
    %v42 = vcvt.s32.f32 %v41
    %vm43 = vcmask 64512
    %v45 = vsel %vm43, %v42, 0
    %47 = vmatpush.msra.mxu0 0.0
    %48 = vmatpush.msra.mxu0 0.0
    %49 = vmatpush.msra.mxu0 0.0
    %50 = vmatpush.msra.mxu0 0.0
    %51 = vmatpush.msra.mxu0 0.0
    %52 = vmatpush.msra.mxu0 0.0
    %53 = vmatpush.msra.mxu0 0.0
    %54 = vmatpush.msra.mxu0 0.0
    %55 = vmatpush.msra.mxu0 0.0
    %56 = vmatpush.msra.mxu0 0.0
    %57 = vmatpush.msra.mxu0 0.0
    %58 = vmatpush.msra.mxu0 0.0
    %59 = vmatpush.msra.mxu0 0.0
    %60 = vmatpush.msra.mxu0 0.0
    %61 = vmatpush.msra.mxu0 0.0
    %62 = vmatpush.msra.mxu0 %v35
    %63 = vmatmul.f32.gmra.mxu0 %v45
    %v64 = vpop.f32.mrf.mxu0
    %v65 = vadd.f32 0.0, %v64
    %66 = vdwg.mxu0
    %v67 = vcvt.f32.s32.to.zero.pseudo %v65
    %v68 = vperm.slane %v65, 7
    %v69 = vsub.f32 %v68, %v65
    %v70 = vadd.f32 %v69, %v35
    %v71 = vcvt.f32.s32.to.zero.pseudo %v70
    %72 = vset.pattern.permute.xlu0 0
    %73 = vperm.xlu0 %72, %v31
    %v74 = vpop.permute.xlu0 %73
    %vm75 = vcmp.eq.s32.totalorder %v39, %v74
    %v76 = vadd.s32 %v32, 27
    %77 = vset.pattern.permute.xlu0 0
    %78 = vperm.xlu0 %77, %v76
    %v79 = vpop.permute.xlu0 %78
    %vm80 = vcmp.eq.s32.totalorder %v39, %v79
    %vm81 = vmor %vm75, %vm80
    %v82 = vadd.s32 %v67, 35
    %83 = vset.pattern.permute.xlu0 0
    %84 = vperm.xlu0 %83, %v82
    %v85 = vpop.permute.xlu0 %84
    %vm86 = vcmp.eq.s32.totalorder %v39, %v85
    %vm87 = vmor %vm81, %vm86
    %v88 = vadd.s32 %v71, 67
    %89 = vset.pattern.permute.xlu0 0
    %90 = vperm.xlu0 %89, %v88
    %v91 = vpop.permute.xlu0 %90
    %vm92 = vcmp.eq.s32.totalorder %v39, %v91
    %vm93 = vmor %vm87, %vm92
    %v94 = vsel %vm93, 1, 0
    %v95 = vcvt.s32.f32 %v94
    %96 = vset.pattern.permute.xlu0 1
    %97 = vperm.xlu0 %96, %v31
    %v98 = vpop.permute.xlu0 %97
    %vm99 = vcmp.eq.s32.totalorder %v39, %v98
    %100 = vset.pattern.permute.xlu0 1
    %101 = vperm.xlu0 %100, %v76
    %v102 = vpop.permute.xlu0 %101
    %vm103 = vcmp.eq.s32.totalorder %v39, %v102
    %vm104 = vmor %vm99, %vm103
    %105 = vset.pattern.permute.xlu0 1
    %106 = vperm.xlu0 %105, %v82
    %v107 = vpop.permute.xlu0 %106
    %vm108 = vcmp.eq.s32.totalorder %v39, %v107
    %vm109 = vmor %vm104, %vm108
    %110 = vset.pattern.permute.xlu0 1
    %111 = vperm.xlu0 %110, %v88
    %v112 = vpop.permute.xlu0 %111
    %vm113 = vcmp.eq.s32.totalorder %v39, %v112
    %vm114 = vmor %vm109, %vm113
    %v115 = vsel %vm114, 1, 0
    %v116 = vcvt.s32.f32 %v115
    %v117 = vld [vmem:[#allocation2] sm:$0xff]
    %v118 = vld [vmem:[#allocation2 + $0x8] sm:$0xff]
    %v119 = vld [vmem:[#allocation2 + $0x10] sm:$0xff]
    %v120 = vld [vmem:[#allocation2 + $0x18] sm:$0xff]
    %v121 = vld [vmem:[#allocation2 + $0x20] sm:$0xff]
    %v122 = vld [vmem:[#allocation2 + $0x28] sm:$0xff]
    %v123 = vld [vmem:[#allocation2 + $0x30] sm:$0xff]
    %v124 = vld [vmem:[#allocation2 + $0x38] sm:$0xff]
    %v125 = vld [vmem:[#allocation2 + $0x40] sm:$0xff]
    %v126 = vld [vmem:[#allocation2 + $0x48] sm:$0xff]
    %v127 = vld [vmem:[#allocation2 + $0x50] sm:$0xff]
    %v128 = vld [vmem:[#allocation2 + $0x58] sm:$0xff]
    %v129 = vld [vmem:[#allocation2 + $0x60] sm:$0xff]
    %v130 = vld [vmem:[#allocation2 + $0x68] sm:$0xff]
    %v131 = vld [vmem:[#allocation2 + $0x70] sm:$0xff]
    %v132 = vld [vmem:[#allocation2 + $0x78] sm:$0xff]
    %v133 = vld [vmem:[#allocation2 + $0x80] sm:$0xff]
    %v134 = vld [vmem:[#allocation2 + $0x88] sm:$0xff]
    %v135 = vld [vmem:[#allocation2 + $0x90] sm:$0xff]
    %v136 = vld [vmem:[#allocation2 + $0x98] sm:$0xff]
    %v137 = vld [vmem:[#allocation2 + $0xa0] sm:$0xff]
    %v138 = vld [vmem:[#allocation2 + $0xa8] sm:$0xff]
    %v139 = vld [vmem:[#allocation2 + $0xb0] sm:$0xff]
    %v140 = vld [vmem:[#allocation2 + $0xb8] sm:$0xff]
    %v141 = vld [vmem:[#allocation2 + $0xc0] sm:$0xff]
    %v142 = vld [vmem:[#allocation2 + $0xc8] sm:$0xff]
    %v143 = vld [vmem:[#allocation2 + $0xd0] sm:$0xff]
    %v144 = vld [vmem:[#allocation2 + $0xd8] sm:$0xff]
    %v145 = vld [vmem:[#allocation2 + $0xe0] sm:$0xff]
    %v146 = vld [vmem:[#allocation2 + $0xe8] sm:$0xff]
    %v147 = vld [vmem:[#allocation2 + $0xf0] sm:$0xff]
    %v148 = vld [vmem:[#allocation2 + $0xf8] sm:$0xff]
    %v149 = vand.u32 %v132, 4294901760
    %150 = vmatpush.msra.mxu0 %v149
    %v151 = vand.u32 %v131, 4294901760
    %152 = vmatpush.msra.mxu0 %v151
    %v153 = vand.u32 %v130, 4294901760
    %154 = vmatpush.msra.mxu0 %v153
    %v155 = vand.u32 %v129, 4294901760
    %156 = vmatpush.msra.mxu0 %v155
    %v157 = vand.u32 %v128, 4294901760
    %158 = vmatpush.msra.mxu0 %v157
    %v159 = vand.u32 %v127, 4294901760
    %160 = vmatpush.msra.mxu0 %v159
    %v161 = vand.u32 %v126, 4294901760
    %162 = vmatpush.msra.mxu0 %v161
    %v163 = vand.u32 %v125, 4294901760
    %164 = vmatpush.msra.mxu0 %v163
    %v165 = vand.u32 %v124, 4294901760
    %166 = vmatpush.msra.mxu0 %v165
    %v167 = vand.u32 %v123, 4294901760
    %168 = vmatpush.msra.mxu0 %v167
    %v169 = vand.u32 %v122, 4294901760
    %170 = vmatpush.msra.mxu0 %v169
    %v171 = vand.u32 %v121, 4294901760
    %172 = vmatpush.msra.mxu0 %v171
    %v173 = vand.u32 %v120, 4294901760
    %174 = vmatpush.msra.mxu0 %v173
    %v175 = vand.u32 %v119, 4294901760
    %176 = vmatpush.msra.mxu0 %v175
    %v177 = vand.u32 %v118, 4294901760
    %178 = vmatpush.msra.mxu0 %v177
    %v179 = vand.u32 %v117, 4294901760
    %180 = vmatpush.msra.mxu0 %v179
    %v181 = vand.u32 %v95, 4294901760
    %v182 = vsub.f32 %v95, %v181
    %v183 = vand.u32 %v182, 4294901760
    %v184 = vsub.f32 %v182, %v183
    %v185 = vand.u32 %v184, 4294901760
    %186 = vmatmul.f32.gmra.mxu0 %v185
    %v187 = vpop.f32.mrf.mxu0
    %v188 = vadd.f32 0.0, %v187
    %189 = vdwg.mxu0
    %v190 = vand.u32 %v132, 4294901760
    %v191 = vsub.f32 %v132, %v190
    %v192 = vand.u32 %v191, 4294901760
    %v193 = vsub.f32 %v191, %v192
    %v194 = vand.u32 %v193, 4294901760
    %195 = vmatpush.msra.mxu0 %v194
    %v196 = vand.u32 %v131, 4294901760
    %v197 = vsub.f32 %v131, %v196
    %v198 = vand.u32 %v197, 4294901760
    %v199 = vsub.f32 %v197, %v198
    %v200 = vand.u32 %v199, 4294901760
    %201 = vmatpush.msra.mxu0 %v200
    %v202 = vand.u32 %v130, 4294901760
    %v203 = vsub.f32 %v130, %v202
    %v204 = vand.u32 %v203, 4294901760
    %v205 = vsub.f32 %v203, %v204
    %v206 = vand.u32 %v205, 4294901760
    %207 = vmatpush.msra.mxu0 %v206
    %v208 = vand.u32 %v129, 4294901760
    %v209 = vsub.f32 %v129, %v208
    %v210 = vand.u32 %v209, 4294901760
    %v211 = vsub.f32 %v209, %v210
    %v212 = vand.u32 %v211, 4294901760
    %213 = vmatpush.msra.mxu0 %v212
    %v214 = vand.u32 %v128, 4294901760
    %v215 = vsub.f32 %v128, %v214
    %v216 = vand.u32 %v215, 4294901760
    %v217 = vsub.f32 %v215, %v216
    %v218 = vand.u32 %v217, 4294901760
    %219 = vmatpush.msra.mxu0 %v218
    %v220 = vand.u32 %v127, 4294901760
    %v221 = vsub.f32 %v127, %v220
    %v222 = vand.u32 %v221, 4294901760
    %v223 = vsub.f32 %v221, %v222
    %v224 = vand.u32 %v223, 4294901760
    %225 = vmatpush.msra.mxu0 %v224
    %v226 = vand.u32 %v126, 4294901760
    %v227 = vsub.f32 %v126, %v226
    %v228 = vand.u32 %v227, 4294901760
    %v229 = vsub.f32 %v227, %v228
    %v230 = vand.u32 %v229, 4294901760
    %231 = vmatpush.msra.mxu0 %v230
    %v232 = vand.u32 %v125, 4294901760
    %v233 = vsub.f32 %v125, %v232
    %v234 = vand.u32 %v233, 4294901760
    %v235 = vsub.f32 %v233, %v234
    %v236 = vand.u32 %v235, 4294901760
    %237 = vmatpush.msra.mxu0 %v236
    %v238 = vand.u32 %v124, 4294901760
    %v239 = vsub.f32 %v124, %v238
    %v240 = vand.u32 %v239, 4294901760
    %v241 = vsub.f32 %v239, %v240
    %v242 = vand.u32 %v241, 4294901760
    %243 = vmatpush.msra.mxu0 %v242
    %v244 = vand.u32 %v123, 4294901760
    %v245 = vsub.f32 %v123, %v244
    %v246 = vand.u32 %v245, 4294901760
    %v247 = vsub.f32 %v245, %v246
    %v248 = vand.u32 %v247, 4294901760
    %249 = vmatpush.msra.mxu0 %v248
    %v250 = vand.u32 %v122, 4294901760
    %v251 = vsub.f32 %v122, %v250
    %v252 = vand.u32 %v251, 4294901760
    %v253 = vsub.f32 %v251, %v252
    %v254 = vand.u32 %v253, 4294901760
    %255 = vmatpush.msra.mxu0 %v254
    %v256 = vand.u32 %v121, 4294901760
    %v257 = vsub.f32 %v121, %v256
    %v258 = vand.u32 %v257, 4294901760
    %v259 = vsub.f32 %v257, %v258
    %v260 = vand.u32 %v259, 4294901760
    %261 = vmatpush.msra.mxu0 %v260
    %v262 = vand.u32 %v120, 4294901760
    %v263 = vsub.f32 %v120, %v262
    %v264 = vand.u32 %v263, 4294901760
    %v265 = vsub.f32 %v263, %v264
    %v266 = vand.u32 %v265, 4294901760
    %267 = vmatpush.msra.mxu0 %v266
    %v268 = vand.u32 %v119, 4294901760
    %v269 = vsub.f32 %v119, %v268
    %v270 = vand.u32 %v269, 4294901760
    %v271 = vsub.f32 %v269, %v270
    %v272 = vand.u32 %v271, 4294901760
    %273 = vmatpush.msra.mxu0 %v272
    %v274 = vand.u32 %v118, 4294901760
    %v275 = vsub.f32 %v118, %v274
    %v276 = vand.u32 %v275, 4294901760
    %v277 = vsub.f32 %v275, %v276
    %v278 = vand.u32 %v277, 4294901760
    %279 = vmatpush.msra.mxu0 %v278
    %v280 = vand.u32 %v117, 4294901760
    %v281 = vsub.f32 %v117, %v280
    %v282 = vand.u32 %v281, 4294901760
    %v283 = vsub.f32 %v281, %v282
    %v284 = vand.u32 %v283, 4294901760
    %285 = vmatpush.msra.mxu0 %v284
    %v286 = vand.u32 %v95, 4294901760
    %287 = vmatmul.f32.gmra.mxu0 %v286
    %v288 = vpop.f32.mrf.mxu0
    %v289 = vadd.f32 %v188, %v288
    %290 = vdwg.mxu0
    %v291 = vand.u32 %v132, 4294901760
    %v292 = vsub.f32 %v132, %v291
    %293 = vmatpush.msra.mxu0 %v292
    %v294 = vand.u32 %v131, 4294901760
    %v295 = vsub.f32 %v131, %v294
    %296 = vmatpush.msra.mxu0 %v295
    %v297 = vand.u32 %v130, 4294901760
    %v298 = vsub.f32 %v130, %v297
    %299 = vmatpush.msra.mxu0 %v298
    %v300 = vand.u32 %v129, 4294901760
    %v301 = vsub.f32 %v129, %v300
    %302 = vmatpush.msra.mxu0 %v301
    %v303 = vand.u32 %v128, 4294901760
    %v304 = vsub.f32 %v128, %v303
    %305 = vmatpush.msra.mxu0 %v304
    %v306 = vand.u32 %v127, 4294901760
    %v307 = vsub.f32 %v127, %v306
    %308 = vmatpush.msra.mxu0 %v307
    %v309 = vand.u32 %v126, 4294901760
    %v310 = vsub.f32 %v126, %v309
    %311 = vmatpush.msra.mxu0 %v310
    %v312 = vand.u32 %v125, 4294901760
    %v313 = vsub.f32 %v125, %v312
    %314 = vmatpush.msra.mxu0 %v313
    %v315 = vand.u32 %v124, 4294901760
    %v316 = vsub.f32 %v124, %v315
    %317 = vmatpush.msra.mxu0 %v316
    %v318 = vand.u32 %v123, 4294901760
    %v319 = vsub.f32 %v123, %v318
    %320 = vmatpush.msra.mxu0 %v319
    %v321 = vand.u32 %v122, 4294901760
    %v322 = vsub.f32 %v122, %v321
    %323 = vmatpush.msra.mxu0 %v322
    %v324 = vand.u32 %v121, 4294901760
    %v325 = vsub.f32 %v121, %v324
    %326 = vmatpush.msra.mxu0 %v325
    %v327 = vand.u32 %v120, 4294901760
    %v328 = vsub.f32 %v120, %v327
    %329 = vmatpush.msra.mxu0 %v328
    %v330 = vand.u32 %v119, 4294901760
    %v331 = vsub.f32 %v119, %v330
    %332 = vmatpush.msra.mxu0 %v331
    %v333 = vand.u32 %v118, 4294901760
    %v334 = vsub.f32 %v118, %v333
    %335 = vmatpush.msra.mxu0 %v334
    %v336 = vand.u32 %v117, 4294901760
    %v337 = vsub.f32 %v117, %v336
    %338 = vmatpush.msra.mxu0 %v337
    %v339 = vand.u32 %v95, 4294901760
    %v340 = vsub.f32 %v95, %v339
    %341 = vmatmul.f32.gmra.mxu0 %v340
    %v342 = vpop.f32.mrf.mxu0
    %v343 = vadd.f32 %v289, %v342
    %344 = vdwg.mxu0
    %v345 = vand.u32 %v132, 4294901760
    %346 = vmatpush.msra.mxu0 %v345
    %v347 = vand.u32 %v131, 4294901760
    %348 = vmatpush.msra.mxu0 %v347
    %v349 = vand.u32 %v130, 4294901760
    %350 = vmatpush.msra.mxu0 %v349
    %v351 = vand.u32 %v129, 4294901760
    %352 = vmatpush.msra.mxu0 %v351
    %v353 = vand.u32 %v128, 4294901760
    %354 = vmatpush.msra.mxu0 %v353
    %v355 = vand.u32 %v127, 4294901760
    %356 = vmatpush.msra.mxu0 %v355
    %v357 = vand.u32 %v126, 4294901760
    %358 = vmatpush.msra.mxu0 %v357
    %v359 = vand.u32 %v125, 4294901760
    %360 = vmatpush.msra.mxu0 %v359
    %v361 = vand.u32 %v124, 4294901760
    %362 = vmatpush.msra.mxu0 %v361
    %v363 = vand.u32 %v123, 4294901760
    %364 = vmatpush.msra.mxu0 %v363
    %v365 = vand.u32 %v122, 4294901760
    %366 = vmatpush.msra.mxu0 %v365
    %v367 = vand.u32 %v121, 4294901760
    %368 = vmatpush.msra.mxu0 %v367
    %v369 = vand.u32 %v120, 4294901760
    %370 = vmatpush.msra.mxu0 %v369
    %v371 = vand.u32 %v119, 4294901760
    %372 = vmatpush.msra.mxu0 %v371
    %v373 = vand.u32 %v118, 4294901760
    %374 = vmatpush.msra.mxu0 %v373
    %v375 = vand.u32 %v117, 4294901760
    %376 = vmatpush.msra.mxu0 %v375
    %v377 = vand.u32 %v95, 4294901760
    %v378 = vsub.f32 %v95, %v377
    %v379 = vand.u32 %v378, 4294901760
    %380 = vmatmul.f32.gmra.mxu0 %v379
    %v381 = vpop.f32.mrf.mxu0
    %v382 = vadd.f32 %v343, %v381
    %383 = vdwg.mxu0
    %v384 = vand.u32 %v132, 4294901760
    %v385 = vsub.f32 %v132, %v384
    %v386 = vand.u32 %v385, 4294901760
    %387 = vmatpush.msra.mxu0 %v386
    %v388 = vand.u32 %v131, 4294901760
    %v389 = vsub.f32 %v131, %v388
    %v390 = vand.u32 %v389, 4294901760
    %391 = vmatpush.msra.mxu0 %v390
    %v392 = vand.u32 %v130, 4294901760
    %v393 = vsub.f32 %v130, %v392
    %v394 = vand.u32 %v393, 4294901760
    %395 = vmatpush.msra.mxu0 %v394
    %v396 = vand.u32 %v129, 4294901760
    %v397 = vsub.f32 %v129, %v396
    %v398 = vand.u32 %v397, 4294901760
    %399 = vmatpush.msra.mxu0 %v398
    %v400 = vand.u32 %v128, 4294901760
    %v401 = vsub.f32 %v128, %v400
    %v402 = vand.u32 %v401, 4294901760
    %403 = vmatpush.msra.mxu0 %v402
    %v404 = vand.u32 %v127, 4294901760
    %v405 = vsub.f32 %v127, %v404
    %v406 = vand.u32 %v405, 4294901760
    %407 = vmatpush.msra.mxu0 %v406
    %v408 = vand.u32 %v126, 4294901760
    %v409 = vsub.f32 %v126, %v408
    %v410 = vand.u32 %v409, 4294901760
    %411 = vmatpush.msra.mxu0 %v410
    %v412 = vand.u32 %v125, 4294901760
    %v413 = vsub.f32 %v125, %v412
    %v414 = vand.u32 %v413, 4294901760
    %415 = vmatpush.msra.mxu0 %v414
    %v416 = vand.u32 %v124, 4294901760
    %v417 = vsub.f32 %v124, %v416
    %v418 = vand.u32 %v417, 4294901760
    %419 = vmatpush.msra.mxu0 %v418
    %v420 = vand.u32 %v123, 4294901760
    %v421 = vsub.f32 %v123, %v420
    %v422 = vand.u32 %v421, 4294901760
    %423 = vmatpush.msra.mxu0 %v422
    %v424 = vand.u32 %v122, 4294901760
    %v425 = vsub.f32 %v122, %v424
    %v426 = vand.u32 %v425, 4294901760
    %427 = vmatpush.msra.mxu0 %v426
    %v428 = vand.u32 %v121, 4294901760
    %v429 = vsub.f32 %v121, %v428
    %v430 = vand.u32 %v429, 4294901760
    %431 = vmatpush.msra.mxu0 %v430
    %v432 = vand.u32 %v120, 4294901760
    %v433 = vsub.f32 %v120, %v432
    %v434 = vand.u32 %v433, 4294901760
    %435 = vmatpush.msra.mxu0 %v434
    %v436 = vand.u32 %v119, 4294901760
    %v437 = vsub.f32 %v119, %v436
    %v438 = vand.u32 %v437, 4294901760
    %439 = vmatpush.msra.mxu0 %v438
    %v440 = vand.u32 %v118, 4294901760
    %v441 = vsub.f32 %v118, %v440
    %v442 = vand.u32 %v441, 4294901760
    %443 = vmatpush.msra.mxu0 %v442
    %v444 = vand.u32 %v117, 4294901760
    %v445 = vsub.f32 %v117, %v444
    %v446 = vand.u32 %v445, 4294901760
    %447 = vmatpush.msra.mxu0 %v446
    %v448 = vand.u32 %v95, 4294901760
    %449 = vmatmul.f32.gmra.mxu0 %v448
    %v450 = vpop.f32.mrf.mxu0
    %v451 = vadd.f32 %v382, %v450
    %452 = vdwg.mxu0
    %v453 = vand.u32 %v132, 4294901760
    %454 = vmatpush.msra.mxu0 %v453
    %v455 = vand.u32 %v131, 4294901760
    %456 = vmatpush.msra.mxu0 %v455
    %v457 = vand.u32 %v130, 4294901760
    %458 = vmatpush.msra.mxu0 %v457
    %v459 = vand.u32 %v129, 4294901760
    %460 = vmatpush.msra.mxu0 %v459
    %v461 = vand.u32 %v128, 4294901760
    %462 = vmatpush.msra.mxu0 %v461
    %v463 = vand.u32 %v127, 4294901760
    %464 = vmatpush.msra.mxu0 %v463
    %v465 = vand.u32 %v126, 4294901760
    %466 = vmatpush.msra.mxu0 %v465
    %v467 = vand.u32 %v125, 4294901760
    %468 = vmatpush.msra.mxu0 %v467
    %v469 = vand.u32 %v124, 4294901760
    %470 = vmatpush.msra.mxu0 %v469
    %v471 = vand.u32 %v123, 4294901760
    %472 = vmatpush.msra.mxu0 %v471
    %v473 = vand.u32 %v122, 4294901760
    %474 = vmatpush.msra.mxu0 %v473
    %v475 = vand.u32 %v121, 4294901760
    %476 = vmatpush.msra.mxu0 %v475
    %v477 = vand.u32 %v120, 4294901760
    %478 = vmatpush.msra.mxu0 %v477
    %v479 = vand.u32 %v119, 4294901760
    %480 = vmatpush.msra.mxu0 %v479
    %v481 = vand.u32 %v118, 4294901760
    %482 = vmatpush.msra.mxu0 %v481
    %v483 = vand.u32 %v117, 4294901760
    %484 = vmatpush.msra.mxu0 %v483
    %v485 = vand.u32 %v95, 4294901760
    %486 = vmatmul.f32.gmra.mxu0 %v485
    %v487 = vpop.f32.mrf.mxu0
    %v488 = vadd.f32 %v451, %v487
    %489 = vdwg.mxu0
    %v490 = vand.u32 %v148, 4294901760
    %491 = vmatpush.msra.mxu0 %v490
    %v492 = vand.u32 %v147, 4294901760
    %493 = vmatpush.msra.mxu0 %v492
    %v494 = vand.u32 %v146, 4294901760
    %495 = vmatpush.msra.mxu0 %v494
    %v496 = vand.u32 %v145, 4294901760
    %497 = vmatpush.msra.mxu0 %v496
    %v498 = vand.u32 %v144, 4294901760
    %499 = vmatpush.msra.mxu0 %v498
    %v500 = vand.u32 %v143, 4294901760
    %501 = vmatpush.msra.mxu0 %v500
    %v502 = vand.u32 %v142, 4294901760
    %503 = vmatpush.msra.mxu0 %v502
    %v504 = vand.u32 %v141, 4294901760
    %505 = vmatpush.msra.mxu0 %v504
    %v506 = vand.u32 %v140, 4294901760
    %507 = vmatpush.msra.mxu0 %v506
    %v508 = vand.u32 %v139, 4294901760
    %509 = vmatpush.msra.mxu0 %v508
    %v510 = vand.u32 %v138, 4294901760
    %511 = vmatpush.msra.mxu0 %v510
    %v512 = vand.u32 %v137, 4294901760
    %513 = vmatpush.msra.mxu0 %v512
    %v514 = vand.u32 %v136, 4294901760
    %515 = vmatpush.msra.mxu0 %v514
    %v516 = vand.u32 %v135, 4294901760
    %517 = vmatpush.msra.mxu0 %v516
    %v518 = vand.u32 %v134, 4294901760
    %519 = vmatpush.msra.mxu0 %v518
    %v520 = vand.u32 %v133, 4294901760
    %521 = vmatpush.msra.mxu0 %v520
    %v522 = vand.u32 %v116, 4294901760
    %v523 = vsub.f32 %v116, %v522
    %v524 = vand.u32 %v523, 4294901760
    %v525 = vsub.f32 %v523, %v524
    %v526 = vand.u32 %v525, 4294901760
    %527 = vmatmul.f32.gmra.mxu0 %v526
    %v528 = vpop.f32.mrf.mxu0
    %v529 = vadd.f32 %v488, %v528
    %530 = vdwg.mxu0
    %v531 = vand.u32 %v148, 4294901760
    %v532 = vsub.f32 %v148, %v531
    %v533 = vand.u32 %v532, 4294901760
    %v534 = vsub.f32 %v532, %v533
    %v535 = vand.u32 %v534, 4294901760
    %536 = vmatpush.msra.mxu0 %v535
    %v537 = vand.u32 %v147, 4294901760
    %v538 = vsub.f32 %v147, %v537
    %v539 = vand.u32 %v538, 4294901760
    %v540 = vsub.f32 %v538, %v539
    %v541 = vand.u32 %v540, 4294901760
    %542 = vmatpush.msra.mxu0 %v541
    %v543 = vand.u32 %v146, 4294901760
    %v544 = vsub.f32 %v146, %v543
    %v545 = vand.u32 %v544, 4294901760
    %v546 = vsub.f32 %v544, %v545
    %v547 = vand.u32 %v546, 4294901760
    %548 = vmatpush.msra.mxu0 %v547
    %v549 = vand.u32 %v145, 4294901760
    %v550 = vsub.f32 %v145, %v549
    %v551 = vand.u32 %v550, 4294901760
    %v552 = vsub.f32 %v550, %v551
    %v553 = vand.u32 %v552, 4294901760
    %554 = vmatpush.msra.mxu0 %v553
    %v555 = vand.u32 %v144, 4294901760
    %v556 = vsub.f32 %v144, %v555
    %v557 = vand.u32 %v556, 4294901760
    %v558 = vsub.f32 %v556, %v557
    %v559 = vand.u32 %v558, 4294901760
    %560 = vmatpush.msra.mxu0 %v559
    %v561 = vand.u32 %v143, 4294901760
    %v562 = vsub.f32 %v143, %v561
    %v563 = vand.u32 %v562, 4294901760
    %v564 = vsub.f32 %v562, %v563
    %v565 = vand.u32 %v564, 4294901760
    %566 = vmatpush.msra.mxu0 %v565
    %v567 = vand.u32 %v142, 4294901760
    %v568 = vsub.f32 %v142, %v567
    %v569 = vand.u32 %v568, 4294901760
    %v570 = vsub.f32 %v568, %v569
    %v571 = vand.u32 %v570, 4294901760
    %572 = vmatpush.msra.mxu0 %v571
    %v573 = vand.u32 %v141, 4294901760
    %v574 = vsub.f32 %v141, %v573
    %v575 = vand.u32 %v574, 4294901760
    %v576 = vsub.f32 %v574, %v575
    %v577 = vand.u32 %v576, 4294901760
    %578 = vmatpush.msra.mxu0 %v577
    %v579 = vand.u32 %v140, 4294901760
    %v580 = vsub.f32 %v140, %v579
    %v581 = vand.u32 %v580, 4294901760
    %v582 = vsub.f32 %v580, %v581
    %v583 = vand.u32 %v582, 4294901760
    %584 = vmatpush.msra.mxu0 %v583
    %v585 = vand.u32 %v139, 4294901760
    %v586 = vsub.f32 %v139, %v585
    %v587 = vand.u32 %v586, 4294901760
    %v588 = vsub.f32 %v586, %v587
    %v589 = vand.u32 %v588, 4294901760
    %590 = vmatpush.msra.mxu0 %v589
    %v591 = vand.u32 %v138, 4294901760
    %v592 = vsub.f32 %v138, %v591
    %v593 = vand.u32 %v592, 4294901760
    %v594 = vsub.f32 %v592, %v593
    %v595 = vand.u32 %v594, 4294901760
    %596 = vmatpush.msra.mxu0 %v595
    %v597 = vand.u32 %v137, 4294901760
    %v598 = vsub.f32 %v137, %v597
    %v599 = vand.u32 %v598, 4294901760
    %v600 = vsub.f32 %v598, %v599
    %v601 = vand.u32 %v600, 4294901760
    %602 = vmatpush.msra.mxu0 %v601
    %v603 = vand.u32 %v136, 4294901760
    %v604 = vsub.f32 %v136, %v603
    %v605 = vand.u32 %v604, 4294901760
    %v606 = vsub.f32 %v604, %v605
    %v607 = vand.u32 %v606, 4294901760
    %608 = vmatpush.msra.mxu0 %v607
    %v609 = vand.u32 %v135, 4294901760
    %v610 = vsub.f32 %v135, %v609
    %v611 = vand.u32 %v610, 4294901760
    %v612 = vsub.f32 %v610, %v611
    %v613 = vand.u32 %v612, 4294901760
    %614 = vmatpush.msra.mxu0 %v613
    %v615 = vand.u32 %v134, 4294901760
    %v616 = vsub.f32 %v134, %v615
    %v617 = vand.u32 %v616, 4294901760
    %v618 = vsub.f32 %v616, %v617
    %v619 = vand.u32 %v618, 4294901760
    %620 = vmatpush.msra.mxu0 %v619
    %v621 = vand.u32 %v133, 4294901760
    %v622 = vsub.f32 %v133, %v621
    %v623 = vand.u32 %v622, 4294901760
    %v624 = vsub.f32 %v622, %v623
    %v625 = vand.u32 %v624, 4294901760
    %626 = vmatpush.msra.mxu0 %v625
    %v627 = vand.u32 %v116, 4294901760
    %628 = vmatmul.f32.gmra.mxu0 %v627
    %v629 = vpop.f32.mrf.mxu0
    %v630 = vadd.f32 %v529, %v629
    %631 = vdwg.mxu0
    %v632 = vand.u32 %v148, 4294901760
    %v633 = vsub.f32 %v148, %v632
    %634 = vmatpush.msra.mxu0 %v633
    %v635 = vand.u32 %v147, 4294901760
    %v636 = vsub.f32 %v147, %v635
    %637 = vmatpush.msra.mxu0 %v636
    %v638 = vand.u32 %v146, 4294901760
    %v639 = vsub.f32 %v146, %v638
    %640 = vmatpush.msra.mxu0 %v639
    %v641 = vand.u32 %v145, 4294901760
    %v642 = vsub.f32 %v145, %v641
    %643 = vmatpush.msra.mxu0 %v642
    %v644 = vand.u32 %v144, 4294901760
    %v645 = vsub.f32 %v144, %v644
    %646 = vmatpush.msra.mxu0 %v645
    %v647 = vand.u32 %v143, 4294901760
    %v648 = vsub.f32 %v143, %v647
    %649 = vmatpush.msra.mxu0 %v648
    %v650 = vand.u32 %v142, 4294901760
    %v651 = vsub.f32 %v142, %v650
    %652 = vmatpush.msra.mxu0 %v651
    %v653 = vand.u32 %v141, 4294901760
    %v654 = vsub.f32 %v141, %v653
    %655 = vmatpush.msra.mxu0 %v654
    %v656 = vand.u32 %v140, 4294901760
    %v657 = vsub.f32 %v140, %v656
    %658 = vmatpush.msra.mxu0 %v657
    %v659 = vand.u32 %v139, 4294901760
    %v660 = vsub.f32 %v139, %v659
    %661 = vmatpush.msra.mxu0 %v660
    %v662 = vand.u32 %v138, 4294901760
    %v663 = vsub.f32 %v138, %v662
    %664 = vmatpush.msra.mxu0 %v663
    %v665 = vand.u32 %v137, 4294901760
    %v666 = vsub.f32 %v137, %v665
    %667 = vmatpush.msra.mxu0 %v666
    %v668 = vand.u32 %v136, 4294901760
    %v669 = vsub.f32 %v136, %v668
    %670 = vmatpush.msra.mxu0 %v669
    %v671 = vand.u32 %v135, 4294901760
    %v672 = vsub.f32 %v135, %v671
    %673 = vmatpush.msra.mxu0 %v672
    %v674 = vand.u32 %v134, 4294901760
    %v675 = vsub.f32 %v134, %v674
    %676 = vmatpush.msra.mxu0 %v675
    %v677 = vand.u32 %v133, 4294901760
    %v678 = vsub.f32 %v133, %v677
    %679 = vmatpush.msra.mxu0 %v678
    %v680 = vand.u32 %v116, 4294901760
    %v681 = vsub.f32 %v116, %v680
    %682 = vmatmul.f32.gmra.mxu0 %v681
    %v683 = vpop.f32.mrf.mxu0
    %v684 = vadd.f32 %v630, %v683
    %685 = vdwg.mxu0
    %v686 = vand.u32 %v148, 4294901760
    %687 = vmatpush.msra.mxu0 %v686
    %v688 = vand.u32 %v147, 4294901760
    %689 = vmatpush.msra.mxu0 %v688
    %v690 = vand.u32 %v146, 4294901760
    %691 = vmatpush.msra.mxu0 %v690
    %v692 = vand.u32 %v145, 4294901760
    %693 = vmatpush.msra.mxu0 %v692
    %v694 = vand.u32 %v144, 4294901760
    %695 = vmatpush.msra.mxu0 %v694
    %v696 = vand.u32 %v143, 4294901760
    %697 = vmatpush.msra.mxu0 %v696
    %v698 = vand.u32 %v142, 4294901760
    %699 = vmatpush.msra.mxu0 %v698
    %v700 = vand.u32 %v141, 4294901760
    %701 = vmatpush.msra.mxu0 %v700
    %v702 = vand.u32 %v140, 4294901760
    %703 = vmatpush.msra.mxu0 %v702
    %v704 = vand.u32 %v139, 4294901760
    %705 = vmatpush.msra.mxu0 %v704
    %v706 = vand.u32 %v138, 4294901760
    %707 = vmatpush.msra.mxu0 %v706
    %v708 = vand.u32 %v137, 4294901760
    %709 = vmatpush.msra.mxu0 %v708
    %v710 = vand.u32 %v136, 4294901760
    %711 = vmatpush.msra.mxu0 %v710
    %v712 = vand.u32 %v135, 4294901760
    %713 = vmatpush.msra.mxu0 %v712
    %v714 = vand.u32 %v134, 4294901760
    %715 = vmatpush.msra.mxu0 %v714
    %v716 = vand.u32 %v133, 4294901760
    %717 = vmatpush.msra.mxu0 %v716
    %v718 = vand.u32 %v116, 4294901760
    %v719 = vsub.f32 %v116, %v718
    %v720 = vand.u32 %v719, 4294901760
    %721 = vmatmul.f32.gmra.mxu0 %v720
    %v722 = vpop.f32.mrf.mxu0
    %v723 = vadd.f32 %v684, %v722
    %724 = vdwg.mxu0
    %v725 = vand.u32 %v148, 4294901760
    %v726 = vsub.f32 %v148, %v725
    %v727 = vand.u32 %v726, 4294901760
    %728 = vmatpush.msra.mxu0 %v727
    %v729 = vand.u32 %v147, 4294901760
    %v730 = vsub.f32 %v147, %v729
    %v731 = vand.u32 %v730, 4294901760
    %732 = vmatpush.msra.mxu0 %v731
    %v733 = vand.u32 %v146, 4294901760
    %v734 = vsub.f32 %v146, %v733
    %v735 = vand.u32 %v734, 4294901760
    %736 = vmatpush.msra.mxu0 %v735
    %v737 = vand.u32 %v145, 4294901760
    %v738 = vsub.f32 %v145, %v737
    %v739 = vand.u32 %v738, 4294901760
    %740 = vmatpush.msra.mxu0 %v739
    %v741 = vand.u32 %v144, 4294901760
    %v742 = vsub.f32 %v144, %v741
    %v743 = vand.u32 %v742, 4294901760
    %744 = vmatpush.msra.mxu0 %v743
    %v745 = vand.u32 %v143, 4294901760
    %v746 = vsub.f32 %v143, %v745
    %v747 = vand.u32 %v746, 4294901760
    %748 = vmatpush.msra.mxu0 %v747
    %v749 = vand.u32 %v142, 4294901760
    %v750 = vsub.f32 %v142, %v749
    %v751 = vand.u32 %v750, 4294901760
    %752 = vmatpush.msra.mxu0 %v751
    %v753 = vand.u32 %v141, 4294901760
    %v754 = vsub.f32 %v141, %v753
    %v755 = vand.u32 %v754, 4294901760
    %756 = vmatpush.msra.mxu0 %v755
    %v757 = vand.u32 %v140, 4294901760
    %v758 = vsub.f32 %v140, %v757
    %v759 = vand.u32 %v758, 4294901760
    %760 = vmatpush.msra.mxu0 %v759
    %v761 = vand.u32 %v139, 4294901760
    %v762 = vsub.f32 %v139, %v761
    %v763 = vand.u32 %v762, 4294901760
    %764 = vmatpush.msra.mxu0 %v763
    %v765 = vand.u32 %v138, 4294901760
    %v766 = vsub.f32 %v138, %v765
    %v767 = vand.u32 %v766, 4294901760
    %768 = vmatpush.msra.mxu0 %v767
    %v769 = vand.u32 %v137, 4294901760
    %v770 = vsub.f32 %v137, %v769
    %v771 = vand.u32 %v770, 4294901760
    %772 = vmatpush.msra.mxu0 %v771
    %v773 = vand.u32 %v136, 4294901760
    %v774 = vsub.f32 %v136, %v773
    %v775 = vand.u32 %v774, 4294901760
    %776 = vmatpush.msra.mxu0 %v775
    %v777 = vand.u32 %v135, 4294901760
    %v778 = vsub.f32 %v135, %v777
    %v779 = vand.u32 %v778, 4294901760
    %780 = vmatpush.msra.mxu0 %v779
    %v781 = vand.u32 %v134, 4294901760
    %v782 = vsub.f32 %v134, %v781
    %v783 = vand.u32 %v782, 4294901760
    %784 = vmatpush.msra.mxu0 %v783
    %v785 = vand.u32 %v133, 4294901760
    %v786 = vsub.f32 %v133, %v785
    %v787 = vand.u32 %v786, 4294901760
    %788 = vmatpush.msra.mxu0 %v787
    %v789 = vand.u32 %v116, 4294901760
    %790 = vmatmul.f32.gmra.mxu0 %v789
    %v791 = vpop.f32.mrf.mxu0
    %v792 = vadd.f32 %v723, %v791
    %793 = vdwg.mxu0
    %v794 = vand.u32 %v148, 4294901760
    %795 = vmatpush.msra.mxu0 %v794
    %v796 = vand.u32 %v147, 4294901760
    %797 = vmatpush.msra.mxu0 %v796
    %v798 = vand.u32 %v146, 4294901760
    %799 = vmatpush.msra.mxu0 %v798
    %v800 = vand.u32 %v145, 4294901760
    %801 = vmatpush.msra.mxu0 %v800
    %v802 = vand.u32 %v144, 4294901760
    %803 = vmatpush.msra.mxu0 %v802
    %v804 = vand.u32 %v143, 4294901760
    %805 = vmatpush.msra.mxu0 %v804
    %v806 = vand.u32 %v142, 4294901760
    %807 = vmatpush.msra.mxu0 %v806
    %v808 = vand.u32 %v141, 4294901760
    %809 = vmatpush.msra.mxu0 %v808
    %v810 = vand.u32 %v140, 4294901760
    %811 = vmatpush.msra.mxu0 %v810
    %v812 = vand.u32 %v139, 4294901760
    %813 = vmatpush.msra.mxu0 %v812
    %v814 = vand.u32 %v138, 4294901760
    %815 = vmatpush.msra.mxu0 %v814
    %v816 = vand.u32 %v137, 4294901760
    %817 = vmatpush.msra.mxu0 %v816
    %v818 = vand.u32 %v136, 4294901760
    %819 = vmatpush.msra.mxu0 %v818
    %v820 = vand.u32 %v135, 4294901760
    %821 = vmatpush.msra.mxu0 %v820
    %v822 = vand.u32 %v134, 4294901760
    %823 = vmatpush.msra.mxu0 %v822
    %v824 = vand.u32 %v133, 4294901760
    %825 = vmatpush.msra.mxu0 %v824
    %v826 = vand.u32 %v116, 4294901760
    %827 = vmatmul.f32.gmra.mxu0 %v826
    %v828 = vpop.f32.mrf.mxu0
    %v829 = vadd.f32 %v792, %v828
    %830 = vdwg.mxu0
    %831 = vst [vmem:[#allocation5] sm:$0xff] %v829
    // Predicated region
    $region18: #{tpu_custom_call.1} parent=1 // pred_check
      _
    $region19: #{tpu_custom_call.1} parent=1 // pred_check_branch
      %833 = sbr.rel (0) target = $region21
    $region20: #{tpu_custom_call.1} parent=1 // pred_region
      %835 = vsyncadd [#allocation4], 0
      %s837 = sshll.u32 [#allocation5], 4
      %s838 = int_to_ptr.vmem [resolvable:$true] %s837
      %s839 = sshll.u32 %s3, 4
      %s840 = int_to_ptr.hbm [resolvable:$true] %s839
      %842 = dma.vmem_to_hbm [thread:$0]  %s838, 128, %s840, [#allocation4]
    $region21: #{tpu_custom_call.1} parent=1 // pred_fallthru
      _
    // Predicated region
    $region22: #{tpu_custom_call.1} parent=1 // pred_check
      _
    $region23: #{tpu_custom_call.1} parent=1 // pred_check_branch
      %844 = sbr.rel (0) target = $region25
    $region24: #{tpu_custom_call.1} parent=1 // pred_region
      %846 = dma.done [#allocation4], 128
    $region25: #{tpu_custom_call.1} parent=1 // pred_fallthru
      _
    %847 = vsyncpa [#allocation3], 1
    %848 = vsyncpa [#allocation4], 1

</llo_original>
